<compile_context>
chip_gen: v7x
topology: tpu7x:2x2x1
jax: 0.10.0
libtpu: 0.0.40
codegen_flags: <defaults>
</compile_context>

<pallas_src>
import functools

import jax
import jax.numpy as jnp
from jax.experimental import pallas as pl
from jax.experimental.pallas import tpu as pltpu


def _csph_matmul_kernel(s_ref, x_ref, o_ref, *, b_blk):
    # s_ref: (d*W, Wo)          per-channel folded weight/selection matrix (VMEM)
    # x_ref: (b_blk, t_ho, d*W) super-rows (d consecutive image rows per row)
    # o_ref: (b_blk, t_ho, Wo)
    s = s_ref[...]
    for n in range(b_blk):                      # small static unroll (b_blk <= 8)
        o_ref[n] = jnp.dot(
            x_ref[n].astype(jnp.float32), s,
            preferred_element_type=jnp.float32,
        ).astype(o_ref.dtype)


def _csph_scale_kernel(w_ref, x_ref, o_ref):
    # down_factor == 1: depthwise 1x1 / stride-1 conv == per-channel scale.
    c = pl.program_id(0)
    o_ref[...] = (x_ref[...] * w_ref[c]).astype(o_ref.dtype)


def csph2d_local_encoding(x, weight, down_factor):
    """Pallas TPU implementation of CSPH2DLocalEncodingLayer.forward.

    x:      (B, k, H, W) NCHW input
    weight: (k, 1, d, d) depthwise Conv2d weight (groups=k, kernel=stride=d, no bias)
    returns (B, k, H//d, W//d)
    """
    B, k, H, W = x.shape
    d = int(down_factor)
    assert weight.shape == (k, 1, d, d)
    assert H % d == 0 and W % d == 0
    ho, wo = H // d, W // d
    dW = d * W
    itemsize = jnp.dtype(x.dtype).itemsize

    # Free reshape only: each super-row packs the d image rows of one output row.
    xr = x.reshape(B, k, ho, dW)

    # ---- per-chip VMEM budget -----------------------------------------------
    try:
        vmem_phys = int(pltpu.get_tpu_info().vmem_capacity_bytes)
    except Exception:
        vmem_phys = 64 * 1024 * 1024          # conservative fallback (v7x per-TC)
    vmem_limit = max(32 * 1024 * 1024,
                     min(3 * vmem_phys // 4, 96 * 1024 * 1024))

    # ---- tile sizing ----------------------------------------------------------
    def _rup(a, m):
        return (a + m - 1) // m * m

    TARGET_BLOCK_BYTES = 2 * 1024 * 1024      # ~2 MiB input block
    MIN_STEPS = 8                             # keep the pipeline / both v7x TCs busy

    row_bytes = _rup(dW, 128) * itemsize
    t_ho = ho
    if _rup(ho, 8) * row_bytes > TARGET_BLOCK_BYTES:
        t_ho = max(8, (TARGET_BLOCK_BYTES // row_bytes) // 8 * 8)

    b_blk = 1
    if t_ho == ho:
        img_bytes = _rup(ho, 8) * row_bytes
        b_blk = int(max(1, min(B, 8, TARGET_BLOCK_BYTES // max(1, img_bytes))))

    def _steps(bb, th):
        return k * pl.cdiv(B, bb) * pl.cdiv(ho, th)

    while b_blk > 1 and _steps(b_blk, t_ho) < MIN_STEPS:
        b_blk -= 1
    while t_ho > 8 and _steps(b_blk, t_ho) < MIN_STEPS:
        t_ho = max(8, (t_ho // 2) // 8 * 8)

    # Keep the double-buffered working set (in + out + S) within the VMEM limit.
    def _ws(bb, th):
        in_b = bb * _rup(th, 8) * _rup(dW, 128) * itemsize
        out_b = bb * _rup(th, 8) * _rup(wo, 128) * itemsize
        s_b = 0 if d == 1 else _rup(dW, 8) * _rup(wo, 128) * 4
        return 2 * (in_b + out_b + s_b)

    while _ws(b_blk, t_ho) > vmem_limit and (b_blk > 1 or t_ho > 8):
        if b_blk > 1:
            b_blk -= 1
        else:
            t_ho = max(8, (t_ho // 2) // 8 * 8)

    grid = (k, pl.cdiv(B, b_blk), pl.cdiv(ho, t_ho))

    cost = pl.CostEstimate(
        flops=int(2 * B * k * ho * wo * d * d),
        transcendentals=0,
        bytes_accessed=int(itemsize * B * k * (H * W + ho * wo)
                           + (0 if d == 1 else 4 * k * dW * wo)),
    )
    cparams = pltpu.CompilerParams(
        dimension_semantics=("parallel", "parallel", "parallel"),
        vmem_limit_bytes=int(vmem_limit),
    )

    x_spec = pl.BlockSpec((b_blk, None, t_ho, dW), lambda c, b, j: (b, c, j, 0))
    o_spec = pl.BlockSpec((b_blk, None, t_ho, wo), lambda c, b, j: (b, c, j, 0))
    out_shape = jax.ShapeDtypeStruct((B, k, ho, wo), x.dtype)

    if d == 1:
        # Per-channel scalar scale: pure VPU, no S table, no matmul.
        w_flat = weight.reshape(k).astype(jnp.float32)
        return pl.pallas_call(
            _csph_scale_kernel,
            out_shape=out_shape,
            grid=grid,
            in_specs=[pl.BlockSpec(memory_space=pltpu.MemorySpace.SMEM), x_spec],
            out_specs=o_spec,
            compiler_params=cparams,
            cost_estimate=cost,
        )(w_flat, xr)

    # ---- fold the depthwise weights into per-channel (d*W, Wo) matrices ------
    m = jnp.arange(dW)
    p_idx = m // W                            # sub-row p of super-row position m
    w_idx = m % W                             # original column w
    sel = (w_idx[:, None] // d == jnp.arange(wo)[None, :]).astype(jnp.float32)
    wcol = weight.reshape(k, d, d).astype(jnp.float32)[:, p_idx, w_idx % d]  # (k, dW)
    s_tbl = wcol[:, :, None] * sel[None, :, :]                               # (k, dW, Wo)

    kernel = functools.partial(_csph_matmul_kernel, b_blk=b_blk)
    return pl.pallas_call(
        kernel,
        out_shape=out_shape,
        grid=grid,
        in_specs=[
            # per-channel folded weight matrix; block index only changes with c,
            # so its DMA is skipped across all (b, j) grid steps.
            pl.BlockSpec((None, dW, wo), lambda c, b, j: (c, 0, 0)),
            x_spec,
        ],
        out_specs=o_spec,
        compiler_params=cparams,
        cost_estimate=cost,
    )(s_tbl, xr)


if __name__ == "__main__":
    # Small shapes consistent with the module: (Batch, k, Nr, Nc)
    B, k, H, W = 2, 4, 16, 16
    down_factor = 2

    key = jax.random.PRNGKey(0)
    kx, kw = jax.random.split(key)
    x = jax.random.normal(kx, (B, k, H, W), dtype=jnp.float32)
    weight = jax.random.normal(
        kw, (k, 1, down_factor, down_factor), dtype=jnp.float32) * 0.1

    out = csph2d_local_encoding(x, weight, down_factor)
    out = jax.block_until_ready(out)

    # Reference: plain-JAX grouped conv (matches PyTorch Conv2d semantics).
    ref = jax.lax.conv_general_dilated(
        x, weight,
        window_strides=(down_factor, down_factor),
        padding="VALID",
        dimension_numbers=("NCHW", "OIHW", "NCHW"),
        feature_group_count=k,
    )
    assert out.shape == (B, k, H // down_factor, W // down_factor)
    assert jnp.allclose(out, ref, atol=1e-4, rtol=1e-4), float(
        jnp.max(jnp.abs(out - ref)))

    # Also exercise the down_factor == 1 (per-channel scale) fast path.
    w1 = jax.random.normal(kw, (k, 1, 1, 1), dtype=jnp.float32)
    out1 = jax.block_until_ready(csph2d_local_encoding(x, w1, 1))
    ref1 = x * w1.reshape(1, k, 1, 1)
    assert out1.shape == x.shape
    assert jnp.allclose(out1, ref1, atol=1e-6, rtol=1e-6)

    print("KERNEL_OK")
</pallas_src>

<mosaic_0001>
module attributes {stable_mosaic.version = 11 : i64} {
  func.func @_csph_matmul_kernel(%arg0: i32, %arg1: i32, %arg2: i32, %arg3: memref<1x32x8xf32, #tpu.memory_space<vmem>>, %arg4: memref<1x1x8x32xf32, #tpu.memory_space<vmem>>, %arg5: memref<1x1x8x8xf32, #tpu.memory_space<vmem>>) attributes {dimension_semantics = [#tpu.dimension_semantics<parallel>, #tpu.dimension_semantics<parallel>, #tpu.dimension_semantics<parallel>], iteration_bounds = array<i64: 4, 2, 1>, scalar_prefetch = 0 : i64, scratch_operands = 0 : i64, tpu.core_type = #tpu.core_type<tc>, window_params = [{transform_indices = @transform_0, window_bounds = array<i64: 1, 32, 8>}, {transform_indices = @transform_1, window_bounds = array<i64: 1, 1, 8, 32>}, {transform_indices = @transform_2, window_bounds = array<i64: 1, 1, 8, 8>}]} {
    %c0 = arith.constant 0 : index
    %c0_0 = arith.constant 0 : index
    %c0_1 = arith.constant 0 : index
    %0 = vector.load %arg3[%c0, %c0_0, %c0_1] : memref<1x32x8xf32, #tpu.memory_space<vmem>>, vector<1x32x8xf32>
    %1 = vector.shape_cast %0 : vector<1x32x8xf32> to vector<32x8xf32>
    %c0_2 = arith.constant 0 : index
    %c0_3 = arith.constant 0 : index
    %c0_4 = arith.constant 0 : index
    %c0_5 = arith.constant 0 : index
    %2 = vector.load %arg4[%c0_2, %c0_3, %c0_4, %c0_5] : memref<1x1x8x32xf32, #tpu.memory_space<vmem>>, vector<1x1x8x32xf32>
    %3 = vector.shape_cast %2 : vector<1x1x8x32xf32> to vector<8x32xf32>
    %cst = arith.constant dense<0.000000e+00> : vector<8x8xf32>
    %4 = tpu.matmul %3, %1, %cst {dimension_numbers = #tpu.dot_dimension_numbers<[1], [0], [0], [1], [0, 0, 1, 1], [], []>} : vector<8x32xf32>, vector<32x8xf32>, vector<8x8xf32> -> vector<8x8xf32>
    %c0_6 = arith.constant 0 : index
    %c0_7 = arith.constant 0 : index
    %c0_8 = arith.constant 0 : index
    %c0_9 = arith.constant 0 : index
    %5 = vector.load %arg5[%c0_6, %c0_7, %c0_8, %c0_9] : memref<1x1x8x8xf32, #tpu.memory_space<vmem>>, vector<1x1x8x8xf32>
    %6 = vector.shape_cast %5 : vector<1x1x8x8xf32> to vector<8x8xf32>
    %7 = vector.shape_cast %4 : vector<8x8xf32> to vector<1x1x8x8xf32>
    tpu.vector_store %arg5[%c0_6, %c0_7, %c0_8, %c0_9], %7 {strides = array<i32>} : memref<1x1x8x8xf32, #tpu.memory_space<vmem>>, vector<1x1x8x8xf32>,
    return
  }
  func.func @transform_0(%arg0: i32, %arg1: i32, %arg2: i32) -> (i32, i32, i32) {
    %c0_i32 = arith.constant 0 : i32
    %c0_i32_0 = arith.constant 0 : i32
    %c0_i32_1 = arith.constant 0 : i32
    return %arg0, %c0_i32, %c0_i32_0 : i32, i32, i32
  }
  func.func @transform_1(%arg0: i32, %arg1: i32, %arg2: i32) -> (i32, i32, i32, i32) {
    %c0_i32 = arith.constant 0 : i32
    %c0_i32_0 = arith.constant 0 : i32
    return %arg1, %arg0, %arg2, %c0_i32 : i32, i32, i32, i32
  }
  func.func @transform_2(%arg0: i32, %arg1: i32, %arg2: i32) -> (i32, i32, i32, i32) {
    %c0_i32 = arith.constant 0 : i32
    %c0_i32_0 = arith.constant 0 : i32
    return %arg1, %arg0, %arg2, %c0_i32 : i32, i32, i32, i32
  }
}

</mosaic_0001>

<llo_original>
// kernel: tpu_custom_call.1
$region0: #{tpu_custom_call.1}
  #allocation0 [shape = 'u32[]', space=smem, size = 0x4, offset = 0x4, fixed_abs, tag = 'smem constant byte address 0x4 - core index']
  #allocation1 [shape = 'u32[144,128]{1,0:T(1,128)}', space=vmem, size = 0x12000, scoped, tag = 'internal scratch']
  %s0 = inlined_call_operand.vmem [shape: f32[4,32,8], index: 0, kind: input, shape index: {}]
  %s1 = inlined_call_operand.vmem [shape: f32[2,4,8,32], index: 1, kind: input, shape index: {}]
  %s2 = inlined_call_operand.hbm [shape: f32[2,4,8,8], index: 2, kind: output, shape index: {}]
  %s3 = sld [smem:[#allocation0]]
  $region41: #{tpu_custom_call.1} parent=0
    _
  %s5 = ssub.s32 1, %s3
  %s6 = scalar_select 0, %s5, %s3
  $region1: #{tpu_custom_call.1} parent=0
    #allocation2 [shape = 'u8[8192]{0}', space=vmem, size = 0x2000, scoped, tag = 'output window, operand 0']
    #allocation3 [shape = 's32[2]{0}', space=sflag, size = 0x8, scoped, tag = 'scoped memory for tpu_custom_call.1']
    %7 = vsyncpa [#allocation3], 0
    %s8 = scalar_lea.sflag [#allocation3], 1
    %9 = vsyncpa %s8, 0
    loop: start=0, step=1, limit=10
    $region2: #{tpu_custom_call.1} parent=1 // loop_pre_header
      _
    $region3: #{tpu_custom_call.1} parent=1 // loop_header
      %s11 = sphi 0, %s15
      %p12 = scmp.ge.s32.totalorder %s11, 10
      %s18 = sphi 0, %s37
      %s19 = sphi 0, %s33
      %s20 = sphi 0, %s29
      %s21 = sphi 0, %s18
      %s22 = sphi 0, %s19
      %s23 = sphi 0, %s20
      %s24 = sphi 0, %s21
      %s25 = sphi 0, %s22
      %s26 = sphi 0, %s23
      %s40 = sphi 0, %s42
      %s43 = sphi 0, %s40
      %s44 = sphi 0, %s43
      %s60 = sphi 0, %s44
      %s70 = sphi 0, %s72
      %s73 = sphi 0, %s70
      %s74 = sphi 0, %s73
      %s90 = sphi 0, %s74
      %s100 = sphi 0, %s102
      %s103 = sphi 0, %s100
      %s104 = sphi 0, %s103
      %s120 = sphi 0, %s104
    $region4: #{tpu_custom_call.1} parent=1 // loop_header_branch
      %14 = sbr.rel (%p12) target = $region8
    $region5: #{tpu_custom_call.1} parent=1 // loop_body
      %s16 = ssub.s32 %s11, 1
      %s17 = ssub.s32 %s11, 2
      %s27 = sadd.s32 1, %s20
      %p28 = scmp.ge.s32.totalorder %s27, 1
      %s29 = scalar_select %p28, 0, %s27
      %s30 = sadd.s32 1, %s19
      %s31 = scalar_select %p28, %s30, %s19
      %p32 = scmp.ge.s32.totalorder %s31, 2
      %s33 = scalar_select %p32, 0, %s31
      %s34 = sadd.s32 1, %s18
      %s35 = scalar_select %p32, %s34, %s18
      %p36 = scmp.ge.s32.totalorder %s35, 4
      %s37 = scalar_select %p36, 0, %s35
      %s38 = ssub.s32 %s18, %s37
      %p39 = scmp.eq.s32.totalorder %s38, 0
      %s41 = sadd.s32 %s40, 1
      %s42 = scalar_select %p39, %s40, %s41
      %p45 = pneg %p39
      %p46 = scmp.eq.s32.totalorder %s11, 7
      %p47 = por %p45, %p46
      %p48 = scmp.ne.s32.totalorder %s40, %s43
      %p49 = scmp.eq.s32.totalorder %s11, 0
      %p50 = por %p48, %p49
      %p51 = scmp.ne.s32.totalorder %s40, %s43
      %p52 = scmp.eq.s32.totalorder %s16, 7
      %p53 = por %p51, %p52
      %p54 = scmp.ne.s32.totalorder %s43, %s44
      %p55 = scmp.eq.s32.totalorder %s16, 0
      %p56 = por %p54, %p55
      %p57 = scmp.ne.s32.totalorder %s43, %s44
      %p58 = scmp.eq.s32.totalorder %s17, 7
      %p59 = por %p57, %p58
      %p61 = scmp.ne.s32.totalorder %s44, %s60
      %p62 = scmp.eq.s32.totalorder %s17, 0
      %p63 = por %p61, %p62
      %s64 = ssub.s32 %s19, %s33
      %s65 = ssub.s32 %s18, %s37
      %s66 = sor.u32 %s64, %s65
      %s67 = ssub.s32 %s20, %s29
      %s68 = sor.u32 %s66, %s67
      %p69 = scmp.eq.s32.totalorder %s68, 0
      %s71 = sadd.s32 %s70, 1
      %s72 = scalar_select %p69, %s70, %s71
      %p75 = pneg %p69
      %p76 = scmp.eq.s32.totalorder %s11, 7
      %p77 = por %p75, %p76
      %p78 = scmp.ne.s32.totalorder %s70, %s73
      %p79 = scmp.eq.s32.totalorder %s11, 0
      %p80 = por %p78, %p79
      %p81 = scmp.ne.s32.totalorder %s70, %s73
      %p82 = scmp.eq.s32.totalorder %s16, 7
      %p83 = por %p81, %p82
      %p84 = scmp.ne.s32.totalorder %s73, %s74
      %p85 = scmp.eq.s32.totalorder %s16, 0
      %p86 = por %p84, %p85
      %p87 = scmp.ne.s32.totalorder %s73, %s74
      %p88 = scmp.eq.s32.totalorder %s17, 7
      %p89 = por %p87, %p88
      %p91 = scmp.ne.s32.totalorder %s74, %s90
      %p92 = scmp.eq.s32.totalorder %s17, 0
      %p93 = por %p91, %p92
      %s94 = ssub.s32 %s19, %s33
      %s95 = ssub.s32 %s18, %s37
      %s96 = sor.u32 %s94, %s95
      %s97 = ssub.s32 %s20, %s29
      %s98 = sor.u32 %s96, %s97
      %p99 = scmp.eq.s32.totalorder %s98, 0
      %s101 = sadd.s32 %s100, 1
      %s102 = scalar_select %p99, %s100, %s101
      %p105 = pneg %p99
      %p106 = scmp.eq.s32.totalorder %s11, 7
      %p107 = por %p105, %p106
      %p108 = scmp.ne.s32.totalorder %s100, %s103
      %p109 = scmp.eq.s32.totalorder %s11, 0
      %p110 = por %p108, %p109
      %p111 = scmp.ne.s32.totalorder %s100, %s103
      %p112 = scmp.eq.s32.totalorder %s16, 7
      %p113 = por %p111, %p112
      %p114 = scmp.ne.s32.totalorder %s103, %s104
      %p115 = scmp.eq.s32.totalorder %s16, 0
      %p116 = por %p114, %p115
      %p117 = scmp.ne.s32.totalorder %s103, %s104
      %p118 = scmp.eq.s32.totalorder %s17, 7
      %p119 = por %p117, %p118
      %p121 = scmp.ne.s32.totalorder %s104, %s120
      %p122 = scmp.eq.s32.totalorder %s17, 0
      %p123 = por %p121, %p122
      %p124 = scmp.le.s32.totalorder 1, %s11
      %p125 = scmp.lt.s32.totalorder %s11, 9
      %p126 = pnand %p124, %p125
      %p127 = pneg %p126
      // Predicated region
      $region9: #{tpu_custom_call.1} parent=5 // pred_check
        _
      $region10: #{tpu_custom_call.1} parent=5 // pred_check_branch
        %129 = sbr.rel (%p126) target = $region12
      $region11: #{tpu_custom_call.1} parent=5 // pred_region
        %s130 = ssub.s32 %s11, 1
      $region12: #{tpu_custom_call.1} parent=5 // pred_fallthru
        _
      %p131 = scmp.lt.s32.totalorder %s11, 8
      // Predicated region
      $region13: #{tpu_custom_call.1} parent=5 // pred_check
        %p132 = pneg %p131
      $region14: #{tpu_custom_call.1} parent=5 // pred_check_branch
        %134 = sbr.rel (%p132) target = $region16
      $region15: #{tpu_custom_call.1} parent=5 // pred_region
        // Predicated region
        $region17: #{tpu_custom_call.1} parent=15 // pred_check
          %p135 = pneg %p50
        $region18: #{tpu_custom_call.1} parent=15 // pred_check_branch
          %137 = sbr.rel (%p135) target = $region20
        $region19: #{tpu_custom_call.1} parent=15 // pred_region
          %p138 = scmp.lt.s32.totalorder %s18, 3
          %s139 = scalar_select %p138, %s18, 3
          %s140 = smul.addr %s139, 4
          %s141 = smul.addr %s140, 8
          %s142 = scalar_lea.vmem %s0, %s141
        $region20: #{tpu_custom_call.1} parent=15 // pred_fallthru
          _
        // Predicated region
        $region21: #{tpu_custom_call.1} parent=15 // pred_check
          %p143 = pneg %p80
        $region22: #{tpu_custom_call.1} parent=15 // pred_check_branch
          %145 = sbr.rel (%p143) target = $region24
        $region23: #{tpu_custom_call.1} parent=15 // pred_region
          %p146 = scmp.lt.s32.totalorder %s19, 1
          %s147 = scalar_select %p146, %s19, 1
          %p148 = scmp.lt.s32.totalorder %s18, 3
          %s149 = scalar_select %p148, %s18, 3
          %p150 = scmp.lt.s32.totalorder %s20, 0
          %s151 = scalar_select %p150, %s20, 0
          %s152 = sadd.s32 %s151, %s149
          %s153 = smul.addr %s147, 4
          %s154 = sadd.s32 %s152, %s153
          %s155 = smul.addr %s154, 8
          %s156 = scalar_lea.vmem %s1, %s155
        $region24: #{tpu_custom_call.1} parent=15 // pred_fallthru
          _
      $region16: #{tpu_custom_call.1} parent=5 // pred_fallthru
        _
      %p157 = scmp.le.s32.totalorder 1, %s11
      %p158 = scmp.lt.s32.totalorder %s11, 9
      %p159 = pnand %p157, %p158
      %p160 = pneg %p159
      // Predicated region
      $region25: #{tpu_custom_call.1} parent=5 // pred_check
        _
      $region26: #{tpu_custom_call.1} parent=5 // pred_check_branch
        %162 = sbr.rel (%p159) target = $region28
      $region27: #{tpu_custom_call.1} parent=5 // pred_region
        %s163 = ssub.s32 %s11, 1
        %p164 = scmp.lt.s32.totalorder %s21, 3
        %s165 = scalar_select %p164, %s21, 3
        %s166 = smul.addr %s165, 4
        %s167 = smul.addr %s166, 8
        %s168 = scalar_lea.vmem %s0, %s167
        %p169 = pneg %p56
        %p170 = pneg %p53
        %p171 = scmp.lt.s32.totalorder %s22, 1
        %s172 = scalar_select %p171, %s22, 1
        %p173 = scmp.lt.s32.totalorder %s21, 3
        %s174 = scalar_select %p173, %s21, 3
        %p175 = scmp.lt.s32.totalorder %s23, 0
        %s176 = scalar_select %p175, %s23, 0
        %s177 = sadd.s32 %s176, %s174
        %s178 = smul.addr %s172, 4
        %s179 = sadd.s32 %s177, %s178
        %s180 = smul.addr %s179, 8
        %s181 = scalar_lea.vmem %s1, %s180
        %p182 = pneg %p86
        %p183 = pneg %p83
        %p184 = pneg %p116
        %p185 = pneg %p113
        %s186 = sand.u32 %s103, 1
        %s187 = scalar_lea.sflag [#allocation3], %s186
        %s188 = sand.u32 %s103, 1
        %s189 = smul.addr %s188, 8
        %s190 = scalar_lea.vmem [#allocation2], %s189
        %p191 = scmp.lt.s32.totalorder %s21, 3
        %s192 = scalar_select %p191, %s21, 3
        %s193 = smul.addr %s192, 4
        %s194 = smul.addr %s193, 8
        %s195 = scalar_lea.vmem %s0, %s194
        %p196 = scmp.lt.s32.totalorder %s22, 1
        %s197 = scalar_select %p196, %s22, 1
        %p198 = scmp.lt.s32.totalorder %s21, 3
        %s199 = scalar_select %p198, %s21, 3
        %p200 = scmp.lt.s32.totalorder %s23, 0
        %s201 = scalar_select %p200, %s23, 0
        %s202 = sadd.s32 %s201, %s199
        %s203 = smul.addr %s197, 4
        %s204 = sadd.s32 %s202, %s203
        %s205 = smul.addr %s204, 8
        %s206 = scalar_lea.vmem %s1, %s205
        %v207 = vld [vmem:[%s195] sm:$0xff]
        %v208 = vld [vmem:[%s195 + $0x8] sm:$0xff]
        %v209 = vld [vmem:[%s195 + $0x10] sm:$0xff]
        %v210 = vld [vmem:[%s195 + $0x18] sm:$0xff]
        %v211 = vld [vmem:[%s206] sm:$0xff]
        %vm212 = vcmask 261120
        %v214 = vsel %vm212, %v211, 0
        %216 = vmatprep.subr.mxu0 0.0
        %217 = vmatpush1.msra.mxu0 %v207
        %218 = vmatprep.subr.mxu0 0.0
        %219 = vmatpush1.msra.mxu0 %v208
        %220 = vmatprep.subr.mxu0 0.0
        %221 = vmatpush1.msra.mxu0 %v209
        %222 = vmatprep.subr.mxu0 0.0
        %223 = vmatpush1.msra.mxu0 %v210
        %224 = vmatprep.subr.mxu0 0.0
        %225 = vmatpush1.msra.mxu0 0.0
        %226 = vmatprep.subr.mxu0 0.0
        %227 = vmatpush1.msra.mxu0 0.0
        %228 = vmatprep.subr.mxu0 0.0
        %229 = vmatpush1.msra.mxu0 0.0
        %230 = vmatprep.subr.mxu0 0.0
        %231 = vmatpush1.msra.mxu0 0.0
        %232 = vmatprep.subr.mxu0 0.0
        %233 = vmatpush1.msra.mxu0 0.0
        %234 = vmatprep.subr.mxu0 0.0
        %235 = vmatpush1.msra.mxu0 0.0
        %236 = vmatprep.subr.mxu0 0.0
        %237 = vmatpush1.msra.mxu0 0.0
        %238 = vmatprep.subr.mxu0 0.0
        %239 = vmatpush1.msra.mxu0 0.0
        %240 = vmatprep.subr.mxu0 0.0
        %241 = vmatpush1.msra.mxu0 0.0
        %242 = vmatprep.subr.mxu0 0.0
        %243 = vmatpush1.msra.mxu0 0.0
        %244 = vmatprep.subr.mxu0 0.0
        %245 = vmatpush1.msra.mxu0 0.0
        %246 = vmatprep.subr.mxu0 0.0
        %247 = vmatpush1.msra.mxu0 0.0
        %248 = vmatprep.subr.mxu0 0.0
        %249 = vmatpush1.msra.mxu0 0.0
        %250 = vmatprep.subr.mxu0 0.0
        %251 = vmatpush1.msra.mxu0 0.0
        %252 = vmatprep.subr.mxu0 0.0
        %253 = vmatpush1.msra.mxu0 0.0
        %254 = vmatprep.subr.mxu0 0.0
        %255 = vmatpush1.msra.mxu0 0.0
        %256 = vmatprep.subr.mxu0 0.0
        %257 = vmatpush1.msra.mxu0 0.0
        %258 = vmatprep.subr.mxu0 0.0
        %259 = vmatpush1.msra.mxu0 0.0
        %260 = vmatprep.subr.mxu0 0.0
        %261 = vmatpush1.msra.mxu0 0.0
        %262 = vmatprep.subr.mxu0 0.0
        %263 = vmatpush1.msra.mxu0 0.0
        %264 = vmatprep.subr.mxu0 0.0
        %265 = vmatpush1.msra.mxu0 0.0
        %266 = vmatprep.subr.mxu0 0.0
        %267 = vmatpush1.msra.mxu0 0.0
        %268 = vmatprep.subr.mxu0 0.0
        %269 = vmatpush1.msra.mxu0 0.0
        %270 = vmatprep.subr.mxu0 0.0
        %271 = vmatpush1.msra.mxu0 0.0
        %272 = vmatprep.subr.mxu0 0.0
        %273 = vmatpush1.msra.mxu0 0.0
        %274 = vmatprep.subr.mxu0 0.0
        %275 = vmatpush1.msra.mxu0 0.0
        %276 = vmatprep.subr.mxu0 0.0
        %277 = vmatpush1.msra.mxu0 0.0
        %278 = vmatprep.subr.mxu0 0.0
        %279 = vmatpush1.msra.mxu0 0.0
        %280 = vmatprep.mubr.f32.mxu0 0.0
        %281 = vmatmul.mubr.f32.gmra.mrb[0].mxu0 %v214
        %v282 = vpop.f32.mrb[0].mxu0
        %v283 = vadd.f32 0.0, %v282
        %v284 = vpop.f32.mrb[0].mxu0
        %285 = vdwg.mxu0
        %vm286 = vcmask 64512
        %287 = vst.msk [vmem:[%s190] sm:$0xff] %vm286, %v283
        %s288 = sand.u32 %s103, 1
        %s289 = scalar_lea.sflag [#allocation3], %s288
        %s290 = sand.u32 %s103, 1
        %s291 = smul.addr %s290, 8
        %s292 = scalar_lea.vmem [#allocation2], %s291
        // Predicated region
        $region29: #{tpu_custom_call.1} parent=27 // pred_check
          %p293 = pneg %p113
        $region30: #{tpu_custom_call.1} parent=27 // pred_check_branch
          %295 = sbr.rel (%p293) target = $region32
        $region31: #{tpu_custom_call.1} parent=27 // pred_region
          %s297 = ssub.s32 128, 128
          %298 = vsyncadd %s289, %s297
          %s299 = sadd.s32 %s23, %s21
          %s300 = smul.addr %s22, 4
          %s301 = sadd.s32 %s299, %s300
          %s302 = smul.addr %s301, 128
          %s303 = scalar_lea.hbm %s2, %s302
          %s305 = sshll.u32 %s292, 4
          %s306 = int_to_ptr.vmem [resolvable:$true] %s305
          %308 = dma.vmem_to_hbm [thread:$0]  %s306, 128, %s303, %s289
        $region32: #{tpu_custom_call.1} parent=27 // pred_fallthru
          _
      $region28: #{tpu_custom_call.1} parent=5 // pred_fallthru
        _
      %p309 = scmp.le.s32.totalorder 2, %s11
      // Predicated region
      $region33: #{tpu_custom_call.1} parent=5 // pred_check
        %p310 = pneg %p309
      $region34: #{tpu_custom_call.1} parent=5 // pred_check_branch
        %312 = sbr.rel (%p310) target = $region36
      $region35: #{tpu_custom_call.1} parent=5 // pred_region
        %s313 = ssub.s32 %s11, 2
        // Predicated region
        $region37: #{tpu_custom_call.1} parent=35 // pred_check
          %p314 = pneg %p119
        $region38: #{tpu_custom_call.1} parent=35 // pred_check_branch
          %316 = sbr.rel (%p314) target = $region40
        $region39: #{tpu_custom_call.1} parent=35 // pred_region
          %s317 = sand.u32 %s104, 1
          %s318 = scalar_lea.sflag [#allocation3], %s317
          %s319 = sand.u32 %s104, 1
          %s320 = smul.addr %s319, 8
          %s321 = scalar_lea.vmem [#allocation2], %s320
          %322 = dma.done %s318, 128
        $region40: #{tpu_custom_call.1} parent=35 // pred_fallthru
          _
      $region36: #{tpu_custom_call.1} parent=5 // pred_fallthru
        _
    $region6: #{tpu_custom_call.1} parent=1 // loop_footer
      %s15 = sadd.s32 1, %s11
    $region7: #{tpu_custom_call.1} parent=1 // loop_footer_branch
      %10 = sbr.rel target = $region3
    $region8: #{tpu_custom_call.1} parent=1 // loop_exit
      _
    %323 = vsyncpa [#allocation3], 1
    %s324 = scalar_lea.sflag [#allocation3], 1
    %325 = vsyncpa %s324, 1

</llo_original>
